<compile_context>
chip_gen: v5e
topology: v5e:2x2
jax: 0.10.0
libtpu: 0.0.40
codegen_flags: <defaults>
</compile_context>

<pallas_src>
import functools

import jax
import jax.numpy as jnp
from jax.experimental import pallas as pl
from jax.experimental.pallas import tpu as pltpu


# --------------------------------------------------------------------------- #
# Kernels
# --------------------------------------------------------------------------- #
def _s2f_kernel_unrolled(x_ref, z_ref, o_ref, *, w_ceil):
    """All w_ceil channels per grid step.  x_ref/z_ref: [tH, W], o_ref: [w_ceil, tH, W]."""
    # v5e's VPU has no bf16 path: upcast once after load, cast only at the store.
    x = x_ref[...].astype(jnp.float32)
    z = z_ref[...].astype(jnp.float32)
    W = x.shape[-1]
    # Single [1, W] lane iota hoisted out of the k loop (1 vreg, not W x W).
    lane = jax.lax.broadcasted_iota(jnp.int32, (1, W), 1)
    for k in range(w_ceil):  # w_ceil small & static -> unrolled
        # out[k, h, w] = z[h, w] * x[h, w + k], zero when w + k >= W.
        xs = x if k == 0 else pltpu.roll(x, (-k) % W, 1)  # xs[h, w] = x[h, (w + k) % W]
        o_ref[k, :, :] = jnp.where(lane < (W - k), z * xs, 0.0).astype(o_ref.dtype)


def _s2f_kernel_kgrid(x_ref, z_ref, o_ref):
    """One k channel per (innermost) grid step.  x_ref/z_ref/o_ref: [tH, W]."""
    k = pl.program_id(2)
    x = x_ref[...].astype(jnp.float32)
    z = z_ref[...].astype(jnp.float32)
    W = x.shape[-1]
    lane = jax.lax.broadcasted_iota(jnp.int32, (1, W), 1)
    shift = jax.lax.rem(W - k, W)          # == (-k) mod W, always >= 0
    xs = pltpu.roll(x, shift, 1)           # dynamic lane rotate (XLU slot)
    o_ref[...] = jnp.where(lane < (W - k), z * xs, 0.0).astype(o_ref.dtype)


# --------------------------------------------------------------------------- #
# Tiling helpers
# --------------------------------------------------------------------------- #
def _vmem_budget_bytes():
    """Generation-aware VMEM budget (~0.35x physical capacity) and the capacity."""
    try:
        cap = int(pltpu.get_tpu_info().vmem_capacity_bytes)
    except Exception:
        cap = 64 << 20  # conservative (v7x-sized) fallback
    return max(8 << 20, int(0.35 * cap)), cap


def _sublane_multiple(*dtypes):
    """Second-to-last block dim must be a multiple of this (unless full extent)."""
    min_itemsize = min(jnp.dtype(d).itemsize for d in dtypes)
    return max(8, 32 // min_itemsize)  # 8 for f32, 16 for bf16, 32 for int8/fp8


def _pick_h_tile(H, max_rows, sublane):
    """Largest legal H tile <= max_rows: full H, a sublane-aligned divisor of H,
    or (fallback) a sublane-aligned tile with a ragged last block."""
    if H <= max_rows:
        return H
    t = (max_rows // sublane) * sublane
    while t >= sublane:
        if H % t == 0:
            return t
        t -= sublane
    # No aligned divisor fits the budget: ragged last tile (Pallas masks the overflow).
    return max(sublane, (max_rows // sublane) * sublane)


# --------------------------------------------------------------------------- #
# Wrapper
# --------------------------------------------------------------------------- #
def space2features(x, z, w_ceil, *, h_tile=None, out_dtype=None, k_grid_threshold=8):
    B, Cx, H, W = x.shape
    assert Cx == 1 and z.shape == (B, 1, H, W)
    assert 1 <= w_ceil <= W
    # Writeback dominates (w_ceil x the input bytes): pass out_dtype=jnp.bfloat16
    # to halve it when the downstream consumer tolerates bf16.
    out_dtype = jnp.dtype(x.dtype) if out_dtype is None else jnp.dtype(out_dtype)
    in_itemsize = jnp.dtype(x.dtype).itemsize
    out_itemsize = out_dtype.itemsize
    sublane = _sublane_multiple(x.dtype, z.dtype, out_dtype)

    # Large w_ceil: block k over the innermost grid axis so the double-buffered
    # output block is 1 channel instead of w_ceil -> much larger H tiles, no
    # fully-unrolled Python k loop blowing up vreg live ranges.
    use_k_grid = w_ceil > k_grid_threshold
    out_ch_per_block = 1 if use_k_grid else w_ceil

    budget_bytes, vmem_cap = _vmem_budget_bytes()
    if h_tile is None:
        # Per tile row: x + z input blocks and the output block, each double-buffered.
        bytes_per_row = 2 * (2 * in_itemsize + out_ch_per_block * out_itemsize) * W
        max_rows = max(sublane, budget_bytes // bytes_per_row)
        if B < 2:  # v7x has 2 TensorCores/chip -> keep >= 2 parallel grid steps
            max_rows = min(max_rows, max(sublane, -(-H // 2)))
        h_tile = _pick_h_tile(H, max_rows, sublane)
    n_h = -(-H // h_tile)  # ragged last tile allowed

    cost = pl.CostEstimate(
        flops=B * w_ceil * H * W,  # one multiply per output element
        transcendentals=0,
        bytes_accessed=B * H * W * (2 * in_itemsize + w_ceil * out_itemsize),
    )
    vmem_limit = int(min(vmem_cap, budget_bytes + (4 << 20)))

    if use_k_grid:
        grid = (B, n_h, w_ceil)  # k innermost: input blocks unchanged across k -> no re-DMA
        in_specs = [
            pl.BlockSpec((None, None, h_tile, W), lambda b, h, k: (b, 0, h, 0)),
            pl.BlockSpec((None, None, h_tile, W), lambda b, h, k: (b, 0, h, 0)),
        ]
        out_specs = pl.BlockSpec((None, None, h_tile, W), lambda b, h, k: (b, k, h, 0))
        dims = ("parallel", "parallel", "arbitrary")
        kernel = _s2f_kernel_kgrid
    else:
        grid = (B, n_h)
        in_specs = [
            pl.BlockSpec((None, None, h_tile, W), lambda b, h: (b, 0, h, 0)),
            pl.BlockSpec((None, None, h_tile, W), lambda b, h: (b, 0, h, 0)),
        ]
        out_specs = pl.BlockSpec((None, w_ceil, h_tile, W), lambda b, h: (b, 0, h, 0))
        dims = ("parallel", "parallel")
        kernel = functools.partial(_s2f_kernel_unrolled, w_ceil=w_ceil)

    # TODO(synk): biggest remaining lever is fusing the downstream consumer of the
    # [B, w_ceil, H, W] tensor (its reduction over k) into this kernel so the
    # w_ceil-expanded tensor never materializes in HBM.
    return pl.pallas_call(
        kernel,
        out_shape=jax.ShapeDtypeStruct((B, w_ceil, H, W), out_dtype),
        grid_spec=pltpu.PrefetchScalarGridSpec(
            num_scalar_prefetch=0,
            grid=grid,
            in_specs=in_specs,
            out_specs=out_specs,
        ),
        compiler_params=pltpu.CompilerParams(
            dimension_semantics=dims,
            vmem_limit_bytes=vmem_limit,
        ),
        cost_estimate=cost,
    )(x, z)


# --------------------------------------------------------------------------- #
# Reference (literal JAX port of the PyTorch forward, fixed deterministic params)
# --------------------------------------------------------------------------- #
def _reference(x, z, w_ceil):
    dt = x.dtype
    # eye_filter: flip(eye(w_ceil), cols) -> [w_ceil, 1, 1, w_ceil]
    eye_filter = jnp.flip(jnp.eye(w_ceil, dtype=dt), axis=1)[:, None, None, :]
    # delay[i, i, 0, i] = 1  -> [w_ceil, w_ceil, 1, w_ceil]
    delay = jnp.zeros((w_ceil, w_ceil, 1, w_ceil), dtype=dt)
    for i in range(w_ceil):
        delay = delay.at[i, i, 0, i].set(1.0)

    dn = jax.lax.conv_dimension_numbers(z.shape, eye_filter.shape, ("NCHW", "OIHW", "NCHW"))
    z_exp = jax.lax.conv_general_dilated(
        z, eye_filter, (1, 1), [(0, 0), (w_ceil - 1, w_ceil - 1)], dimension_numbers=dn
    )[..., : z.shape[3]]
    x_exp = x * z_exp
    dn2 = jax.lax.conv_dimension_numbers(x_exp.shape, delay.shape, ("NCHW", "OIHW", "NCHW"))
    out = jax.lax.conv_general_dilated(
        x_exp, delay, (1, 1), [(0, 0), (w_ceil - 1, w_ceil - 1)], dimension_numbers=dn2
    )[..., w_ceil - 1 :]
    return out


if __name__ == "__main__":
    key = jax.random.PRNGKey(0)
    kx, kz = jax.random.split(key)

    # Lane-aligned W (multiple of 128) so per-channel stores are unmasked vst.
    B, H, W = 2, 16, 128
    x = jax.random.normal(kx, (B, 1, H, W), dtype=jnp.float32)
    z = jax.random.normal(kz, (B, 1, H, W), dtype=jnp.float32)

    # Small w_ceil -> fully unrolled kernel (one grid step per (b, h-tile)).
    w_small = 4
    out = space2features(x, z, w_small)
    jax.block_until_ready(out)
    ref = _reference(x, z, w_small)
    assert out.shape == (B, w_small, H, W)
    assert jnp.allclose(out, ref, atol=1e-5, rtol=1e-5)

    # Larger w_ceil -> k blocked over the innermost grid axis (dynamic lane roll).
    w_big = 10
    out_big = space2features(x, z, w_big)
    jax.block_until_ready(out_big)
    ref_big = _reference(x, z, w_big)
    assert out_big.shape == (B, w_big, H, W)
    assert jnp.allclose(out_big, ref_big, atol=1e-5, rtol=1e-5)

    print("KERNEL_OK")
</pallas_src>

<mosaic_0001>
module attributes {stable_mosaic.version = 11 : i64} {
  func.func @_s2f_kernel_unrolled(%arg0: i32, %arg1: i32, %arg2: memref<1x1x16x128xf32, #tpu.memory_space<vmem>>, %arg3: memref<1x1x16x128xf32, #tpu.memory_space<vmem>>, %arg4: memref<1x4x16x128xf32, #tpu.memory_space<vmem>>) attributes {dimension_semantics = [#tpu.dimension_semantics<parallel>, #tpu.dimension_semantics<parallel>], iteration_bounds = array<i64: 2, 1>, scalar_prefetch = 0 : i64, scratch_operands = 0 : i64, tpu.core_type = #tpu.core_type<tc>, window_params = [{transform_indices = @transform_0, window_bounds = array<i64: 1, 1, 16, 128>}, {transform_indices = @transform_1, window_bounds = array<i64: 1, 1, 16, 128>}, {transform_indices = @transform_2, window_bounds = array<i64: 1, 4, 16, 128>}]} {
    %c0 = arith.constant 0 : index
    %c0_0 = arith.constant 0 : index
    %c0_1 = arith.constant 0 : index
    %c0_2 = arith.constant 0 : index
    %0 = vector.load %arg2[%c0, %c0_0, %c0_1, %c0_2] : memref<1x1x16x128xf32, #tpu.memory_space<vmem>>, vector<1x1x16x128xf32>
    %1 = vector.shape_cast %0 : vector<1x1x16x128xf32> to vector<16x128xf32>
    %c0_3 = arith.constant 0 : index
    %c0_4 = arith.constant 0 : index
    %c0_5 = arith.constant 0 : index
    %c0_6 = arith.constant 0 : index
    %2 = vector.load %arg3[%c0_3, %c0_4, %c0_5, %c0_6] : memref<1x1x16x128xf32, #tpu.memory_space<vmem>>, vector<1x1x16x128xf32>
    %3 = vector.shape_cast %2 : vector<1x1x16x128xf32> to vector<16x128xf32>
    %4 = tpu.iota {dimensions = array<i32: 1>} : vector<1x128xi32>
    %c128_i32 = arith.constant 128 : i32
    %5 = vector.broadcast %c128_i32 : i32 to vector<1x128xi32>
    %6 = arith.cmpi slt, %4, %5 : vector<1x128xi32>
    %7 = arith.mulf %3, %1 : vector<16x128xf32>
    %cst = arith.constant 0.000000e+00 : f32
    %8 = vector.shape_cast %6 : vector<1x128xi1> to vector<1x128xi1>
    %9 = vector.broadcast %8 : vector<1x128xi1> to vector<16x128xi1>
    %10 = vector.broadcast %cst : f32 to vector<16x128xf32>
    %11 = arith.select %9, %7, %10 : vector<16x128xi1>, vector<16x128xf32>
    %c0_7 = arith.constant 0 : index
    %c0_8 = arith.constant 0 : index
    %c0_9 = arith.constant 0 : index
    %c0_10 = arith.constant 0 : index
    %12 = vector.load %arg4[%c0_7, %c0_8, %c0_9, %c0_10] : memref<1x4x16x128xf32, #tpu.memory_space<vmem>>, vector<1x1x16x128xf32>
    %13 = vector.shape_cast %12 : vector<1x1x16x128xf32> to vector<16x128xf32>
    %14 = vector.shape_cast %11 : vector<16x128xf32> to vector<1x1x16x128xf32>
    tpu.vector_store %arg4[%c0_7, %c0_8, %c0_9, %c0_10], %14 {strides = array<i32>} : memref<1x4x16x128xf32, #tpu.memory_space<vmem>>, vector<1x1x16x128xf32>,
    %c127_i32 = arith.constant 127 : i32
    %15 = tpu.dynamic_rotate %1 by %c127_i32 dim 1 : vector<16x128xf32>, i32 -> vector<16x128xf32>
    %c127_i32_11 = arith.constant 127 : i32
    %16 = vector.broadcast %c127_i32_11 : i32 to vector<1x128xi32>
    %17 = arith.cmpi slt, %4, %16 : vector<1x128xi32>
    %18 = arith.mulf %3, %15 : vector<16x128xf32>
    %cst_12 = arith.constant 0.000000e+00 : f32
    %19 = vector.shape_cast %17 : vector<1x128xi1> to vector<1x128xi1>
    %20 = vector.broadcast %19 : vector<1x128xi1> to vector<16x128xi1>
    %21 = vector.broadcast %cst_12 : f32 to vector<16x128xf32>
    %22 = arith.select %20, %18, %21 : vector<16x128xi1>, vector<16x128xf32>
    %c0_13 = arith.constant 0 : index
    %c1 = arith.constant 1 : index
    %c0_14 = arith.constant 0 : index
    %c0_15 = arith.constant 0 : index
    %23 = vector.load %arg4[%c0_13, %c1, %c0_14, %c0_15] : memref<1x4x16x128xf32, #tpu.memory_space<vmem>>, vector<1x1x16x128xf32>
    %24 = vector.shape_cast %23 : vector<1x1x16x128xf32> to vector<16x128xf32>
    %25 = vector.shape_cast %22 : vector<16x128xf32> to vector<1x1x16x128xf32>
    tpu.vector_store %arg4[%c0_13, %c1, %c0_14, %c0_15], %25 {strides = array<i32>} : memref<1x4x16x128xf32, #tpu.memory_space<vmem>>, vector<1x1x16x128xf32>,
    %c126_i32 = arith.constant 126 : i32
    %26 = tpu.dynamic_rotate %1 by %c126_i32 dim 1 : vector<16x128xf32>, i32 -> vector<16x128xf32>
    %c126_i32_16 = arith.constant 126 : i32
    %27 = vector.broadcast %c126_i32_16 : i32 to vector<1x128xi32>
    %28 = arith.cmpi slt, %4, %27 : vector<1x128xi32>
    %29 = arith.mulf %3, %26 : vector<16x128xf32>
    %cst_17 = arith.constant 0.000000e+00 : f32
    %30 = vector.shape_cast %28 : vector<1x128xi1> to vector<1x128xi1>
    %31 = vector.broadcast %30 : vector<1x128xi1> to vector<16x128xi1>
    %32 = vector.broadcast %cst_17 : f32 to vector<16x128xf32>
    %33 = arith.select %31, %29, %32 : vector<16x128xi1>, vector<16x128xf32>
    %c0_18 = arith.constant 0 : index
    %c2 = arith.constant 2 : index
    %c0_19 = arith.constant 0 : index
    %c0_20 = arith.constant 0 : index
    %34 = vector.load %arg4[%c0_18, %c2, %c0_19, %c0_20] : memref<1x4x16x128xf32, #tpu.memory_space<vmem>>, vector<1x1x16x128xf32>
    %35 = vector.shape_cast %34 : vector<1x1x16x128xf32> to vector<16x128xf32>
    %36 = vector.shape_cast %33 : vector<16x128xf32> to vector<1x1x16x128xf32>
    tpu.vector_store %arg4[%c0_18, %c2, %c0_19, %c0_20], %36 {strides = array<i32>} : memref<1x4x16x128xf32, #tpu.memory_space<vmem>>, vector<1x1x16x128xf32>,
    %c125_i32 = arith.constant 125 : i32
    %37 = tpu.dynamic_rotate %1 by %c125_i32 dim 1 : vector<16x128xf32>, i32 -> vector<16x128xf32>
    %c125_i32_21 = arith.constant 125 : i32
    %38 = vector.broadcast %c125_i32_21 : i32 to vector<1x128xi32>
    %39 = arith.cmpi slt, %4, %38 : vector<1x128xi32>
    %40 = arith.mulf %3, %37 : vector<16x128xf32>
    %cst_22 = arith.constant 0.000000e+00 : f32
    %41 = vector.shape_cast %39 : vector<1x128xi1> to vector<1x128xi1>
    %42 = vector.broadcast %41 : vector<1x128xi1> to vector<16x128xi1>
    %43 = vector.broadcast %cst_22 : f32 to vector<16x128xf32>
    %44 = arith.select %42, %40, %43 : vector<16x128xi1>, vector<16x128xf32>
    %c0_23 = arith.constant 0 : index
    %c3 = arith.constant 3 : index
    %c0_24 = arith.constant 0 : index
    %c0_25 = arith.constant 0 : index
    %45 = vector.load %arg4[%c0_23, %c3, %c0_24, %c0_25] : memref<1x4x16x128xf32, #tpu.memory_space<vmem>>, vector<1x1x16x128xf32>
    %46 = vector.shape_cast %45 : vector<1x1x16x128xf32> to vector<16x128xf32>
    %47 = vector.shape_cast %44 : vector<16x128xf32> to vector<1x1x16x128xf32>
    tpu.vector_store %arg4[%c0_23, %c3, %c0_24, %c0_25], %47 {strides = array<i32>} : memref<1x4x16x128xf32, #tpu.memory_space<vmem>>, vector<1x1x16x128xf32>,
    return
  }
  func.func @transform_0(%arg0: i32, %arg1: i32) -> (i32, i32, i32, i32) {
    %c0_i32 = arith.constant 0 : i32
    %c0_i32_0 = arith.constant 0 : i32
    %c0_i32_1 = arith.constant 0 : i32
    return %arg0, %c0_i32, %arg1, %c0_i32_0 : i32, i32, i32, i32
  }
  func.func @transform_1(%arg0: i32, %arg1: i32) -> (i32, i32, i32, i32) {
    %c0_i32 = arith.constant 0 : i32
    %c0_i32_0 = arith.constant 0 : i32
    %c0_i32_1 = arith.constant 0 : i32
    return %arg0, %c0_i32, %arg1, %c0_i32_0 : i32, i32, i32, i32
  }
  func.func @transform_2(%arg0: i32, %arg1: i32) -> (i32, i32, i32, i32) {
    %c0_i32 = arith.constant 0 : i32
    %c0_i32_0 = arith.constant 0 : i32
    %c0_i32_1 = arith.constant 0 : i32
    return %arg0, %c0_i32, %arg1, %c0_i32_0 : i32, i32, i32, i32
  }
}

</mosaic_0001>

<llo_original>
// kernel: tpu_custom_call.1
$region0: #{tpu_custom_call.1}
  #allocation0 [shape = 'u32[]', space=smem, size = 0x4, offset = 0x4, fixed_abs, tag = 'smem constant byte address 0x4 - core index']
  #allocation1 [shape = 'u32[72,128]{1,0:T(1,128)}', space=vmem, size = 0x9000, scoped, tag = 'internal scratch']
  %s0 = inlined_call_operand.hbm [shape: f32[2,1,16,128], index: 0, kind: input, shape index: {}]
  %s1 = inlined_call_operand.hbm [shape: f32[2,1,16,128], index: 1, kind: input, shape index: {}]
  %s2 = inlined_call_operand.hbm [shape: f32[2,4,16,128], index: 2, kind: output, shape index: {}]
  %s3 = sld [smem:[#allocation0]]
  $region49: #{tpu_custom_call.1} parent=0
    _
  %s5 = ssub.s32 1, %s3
  %s6 = scalar_select 0, %s5, %s3
  $region1: #{tpu_custom_call.1} parent=0
    #allocation2 [shape = 'u8[16384]{0}', space=vmem, size = 0x4000, scoped, tag = 'input window, operand 0']
    #allocation3 [shape = 's32[2]{0}', space=sflag, size = 0x8, scoped, tag = 'scoped memory for tpu_custom_call.1']
    #allocation4 [shape = 's32[2]{0}', space=sflag, size = 0x8, scoped, tag = 'scoped memory for tpu_custom_call.1']
    #allocation5 [shape = 'u8[16384]{0}', space=vmem, size = 0x4000, scoped, tag = 'input window, operand 1']
    #allocation6 [shape = 's32[2]{0}', space=sflag, size = 0x8, scoped, tag = 'scoped memory for tpu_custom_call.1']
    #allocation7 [shape = 'u8[65536]{0}', space=vmem, size = 0x10000, scoped, tag = 'output window, operand 0']
    %7 = vsyncpa [#allocation3], 0
    %s8 = scalar_lea.sflag [#allocation3], 1
    %9 = vsyncpa %s8, 0
    %10 = vsyncpa [#allocation6], 0
    %s11 = scalar_lea.sflag [#allocation6], 1
    %12 = vsyncpa %s11, 0
    %13 = vsyncpa [#allocation4], 0
    %s14 = scalar_lea.sflag [#allocation4], 1
    %15 = vsyncpa %s14, 0
    loop: start=0, step=1, limit=4
    $region2: #{tpu_custom_call.1} parent=1 // loop_pre_header
      _
    $region3: #{tpu_custom_call.1} parent=1 // loop_header
      %s17 = sphi 0, %s21
      %p18 = scmp.ge.s32.totalorder %s17, 4
      %s24 = sphi 0, %s36
      %s25 = sphi 0, %s32
      %s26 = sphi 0, %s24
      %s27 = sphi 0, %s25
      %s28 = sphi 0, %s26
      %s29 = sphi 0, %s27
      %s41 = sphi 0, %s43
      %s44 = sphi 0, %s41
      %s45 = sphi 0, %s44
      %s61 = sphi 0, %s45
      %s69 = sphi 0, %s71
      %s72 = sphi 0, %s69
      %s73 = sphi 0, %s72
      %s89 = sphi 0, %s73
      %s97 = sphi 0, %s99
      %s100 = sphi 0, %s97
      %s101 = sphi 0, %s100
      %s117 = sphi 0, %s101
    $region4: #{tpu_custom_call.1} parent=1 // loop_header_branch
      %20 = sbr.rel (%p18) target = $region8
    $region5: #{tpu_custom_call.1} parent=1 // loop_body
      %s22 = ssub.s32 %s17, 1
      %s23 = ssub.s32 %s17, 2
      %s30 = sadd.s32 1, %s25
      %p31 = scmp.ge.s32.totalorder %s30, 1
      %s32 = scalar_select %p31, 0, %s30
      %s33 = sadd.s32 1, %s24
      %s34 = scalar_select %p31, %s33, %s24
      %p35 = scmp.ge.s32.totalorder %s34, 2
      %s36 = scalar_select %p35, 0, %s34
      %s37 = ssub.s32 %s24, %s36
      %s38 = ssub.s32 %s25, %s32
      %s39 = sor.u32 %s37, %s38
      %p40 = scmp.eq.s32.totalorder %s39, 0
      %s42 = sadd.s32 %s41, 1
      %s43 = scalar_select %p40, %s41, %s42
      %p46 = pneg %p40
      %p47 = scmp.eq.s32.totalorder %s17, 1
      %p48 = por %p46, %p47
      %p49 = scmp.ne.s32.totalorder %s41, %s44
      %p50 = scmp.eq.s32.totalorder %s17, 0
      %p51 = por %p49, %p50
      %p52 = scmp.ne.s32.totalorder %s41, %s44
      %p53 = scmp.eq.s32.totalorder %s22, 1
      %p54 = por %p52, %p53
      %p55 = scmp.ne.s32.totalorder %s44, %s45
      %p56 = scmp.eq.s32.totalorder %s22, 0
      %p57 = por %p55, %p56
      %p58 = scmp.ne.s32.totalorder %s44, %s45
      %p59 = scmp.eq.s32.totalorder %s23, 1
      %p60 = por %p58, %p59
      %p62 = scmp.ne.s32.totalorder %s45, %s61
      %p63 = scmp.eq.s32.totalorder %s23, 0
      %p64 = por %p62, %p63
      %s65 = ssub.s32 %s24, %s36
      %s66 = ssub.s32 %s25, %s32
      %s67 = sor.u32 %s65, %s66
      %p68 = scmp.eq.s32.totalorder %s67, 0
      %s70 = sadd.s32 %s69, 1
      %s71 = scalar_select %p68, %s69, %s70
      %p74 = pneg %p68
      %p75 = scmp.eq.s32.totalorder %s17, 1
      %p76 = por %p74, %p75
      %p77 = scmp.ne.s32.totalorder %s69, %s72
      %p78 = scmp.eq.s32.totalorder %s17, 0
      %p79 = por %p77, %p78
      %p80 = scmp.ne.s32.totalorder %s69, %s72
      %p81 = scmp.eq.s32.totalorder %s22, 1
      %p82 = por %p80, %p81
      %p83 = scmp.ne.s32.totalorder %s72, %s73
      %p84 = scmp.eq.s32.totalorder %s22, 0
      %p85 = por %p83, %p84
      %p86 = scmp.ne.s32.totalorder %s72, %s73
      %p87 = scmp.eq.s32.totalorder %s23, 1
      %p88 = por %p86, %p87
      %p90 = scmp.ne.s32.totalorder %s73, %s89
      %p91 = scmp.eq.s32.totalorder %s23, 0
      %p92 = por %p90, %p91
      %s93 = ssub.s32 %s24, %s36
      %s94 = ssub.s32 %s25, %s32
      %s95 = sor.u32 %s93, %s94
      %p96 = scmp.eq.s32.totalorder %s95, 0
      %s98 = sadd.s32 %s97, 1
      %s99 = scalar_select %p96, %s97, %s98
      %p102 = pneg %p96
      %p103 = scmp.eq.s32.totalorder %s17, 1
      %p104 = por %p102, %p103
      %p105 = scmp.ne.s32.totalorder %s97, %s100
      %p106 = scmp.eq.s32.totalorder %s17, 0
      %p107 = por %p105, %p106
      %p108 = scmp.ne.s32.totalorder %s97, %s100
      %p109 = scmp.eq.s32.totalorder %s22, 1
      %p110 = por %p108, %p109
      %p111 = scmp.ne.s32.totalorder %s100, %s101
      %p112 = scmp.eq.s32.totalorder %s22, 0
      %p113 = por %p111, %p112
      %p114 = scmp.ne.s32.totalorder %s100, %s101
      %p115 = scmp.eq.s32.totalorder %s23, 1
      %p116 = por %p114, %p115
      %p118 = scmp.ne.s32.totalorder %s101, %s117
      %p119 = scmp.eq.s32.totalorder %s23, 0
      %p120 = por %p118, %p119
      %p121 = scmp.le.s32.totalorder 1, %s17
      %p122 = scmp.lt.s32.totalorder %s17, 3
      %p123 = pnand %p121, %p122
      %p124 = pneg %p123
      // Predicated region
      $region9: #{tpu_custom_call.1} parent=5 // pred_check
        _
      $region10: #{tpu_custom_call.1} parent=5 // pred_check_branch
        %126 = sbr.rel (%p123) target = $region12
      $region11: #{tpu_custom_call.1} parent=5 // pred_region
        %s127 = ssub.s32 %s17, 1
      $region12: #{tpu_custom_call.1} parent=5 // pred_fallthru
        _
      %p128 = scmp.lt.s32.totalorder %s17, 2
      // Predicated region
      $region13: #{tpu_custom_call.1} parent=5 // pred_check
        %p129 = pneg %p128
      $region14: #{tpu_custom_call.1} parent=5 // pred_check_branch
        %131 = sbr.rel (%p129) target = $region16
      $region15: #{tpu_custom_call.1} parent=5 // pred_region
        // Predicated region
        $region17: #{tpu_custom_call.1} parent=15 // pred_check
          %p132 = pneg %p51
        $region18: #{tpu_custom_call.1} parent=15 // pred_check_branch
          %134 = sbr.rel (%p132) target = $region20
        $region19: #{tpu_custom_call.1} parent=15 // pred_region
          %s135 = sand.u32 %s41, 1
          %s136 = scalar_lea.sflag [#allocation3], %s135
          %s137 = sand.u32 %s41, 1
          %s138 = smul.addr %s137, 16
          %s139 = scalar_lea.vmem [#allocation2], %s138
          %s140 = smul.u32 2, %s25
          %142 = vsyncadd %s136, 0
          %s143 = smul.addr %s24, 2
          %s144 = sadd.s32 %s140, %s143
          %s145 = smul.addr %s144, 8
          %s146 = scalar_lea.hbm %s0, %s145
          %s147 = sshll.u32 %s146, 4
          %s148 = int_to_ptr.hbm [resolvable:$true] %s147
          %s149 = sshll.u32 %s139, 4
          %s150 = int_to_ptr.vmem [resolvable:$true] %s149
          %155 = dma.hbm_to_vmem [thread:$0]  %s148, 256, %s150, %s136, 128, 128, 8
        $region20: #{tpu_custom_call.1} parent=15 // pred_fallthru
          _
        // Predicated region
        $region21: #{tpu_custom_call.1} parent=15 // pred_check
          %p156 = pneg %p79
        $region22: #{tpu_custom_call.1} parent=15 // pred_check_branch
          %158 = sbr.rel (%p156) target = $region24
        $region23: #{tpu_custom_call.1} parent=15 // pred_region
          %s159 = sand.u32 %s69, 1
          %s160 = scalar_lea.sflag [#allocation6], %s159
          %s161 = sand.u32 %s69, 1
          %s162 = smul.addr %s161, 16
          %s163 = scalar_lea.vmem [#allocation5], %s162
          %s164 = smul.u32 2, %s25
          %166 = vsyncadd %s160, 0
          %s167 = smul.addr %s24, 2
          %s168 = sadd.s32 %s164, %s167
          %s169 = smul.addr %s168, 8
          %s170 = scalar_lea.hbm %s1, %s169
          %s171 = sshll.u32 %s170, 4
          %s172 = int_to_ptr.hbm [resolvable:$true] %s171
          %s173 = sshll.u32 %s163, 4
          %s174 = int_to_ptr.vmem [resolvable:$true] %s173
          %179 = dma.hbm_to_vmem [thread:$0]  %s172, 256, %s174, %s160, 128, 128, 8
        $region24: #{tpu_custom_call.1} parent=15 // pred_fallthru
          _
      $region16: #{tpu_custom_call.1} parent=5 // pred_fallthru
        _
      %p180 = scmp.le.s32.totalorder 1, %s17
      %p181 = scmp.lt.s32.totalorder %s17, 3
      %p182 = pnand %p180, %p181
      %p183 = pneg %p182
      // Predicated region
      $region25: #{tpu_custom_call.1} parent=5 // pred_check
        _
      $region26: #{tpu_custom_call.1} parent=5 // pred_check_branch
        %185 = sbr.rel (%p182) target = $region28
      $region27: #{tpu_custom_call.1} parent=5 // pred_region
        %s186 = ssub.s32 %s17, 1
        %s187 = sand.u32 %s44, 1
        %s188 = scalar_lea.sflag [#allocation3], %s187
        %s189 = sand.u32 %s44, 1
        %s190 = smul.addr %s189, 16
        %s191 = scalar_lea.vmem [#allocation2], %s190
        // Predicated region
        $region29: #{tpu_custom_call.1} parent=27 // pred_check
          %p192 = pneg %p57
        $region30: #{tpu_custom_call.1} parent=27 // pred_check_branch
          %194 = sbr.rel (%p192) target = $region32
        $region31: #{tpu_custom_call.1} parent=27 // pred_region
          %196 = dma.done %s188, 256
        $region32: #{tpu_custom_call.1} parent=27 // pred_fallthru
          _
        %s197 = sand.u32 %s72, 1
        %s198 = scalar_lea.sflag [#allocation6], %s197
        %s199 = sand.u32 %s72, 1
        %s200 = smul.addr %s199, 16
        %s201 = scalar_lea.vmem [#allocation5], %s200
        // Predicated region
        $region33: #{tpu_custom_call.1} parent=27 // pred_check
          %p202 = pneg %p85
        $region34: #{tpu_custom_call.1} parent=27 // pred_check_branch
          %204 = sbr.rel (%p202) target = $region36
        $region35: #{tpu_custom_call.1} parent=27 // pred_region
          %206 = dma.done %s198, 256
        $region36: #{tpu_custom_call.1} parent=27 // pred_fallthru
          _
        %s207 = sand.u32 %s44, 1
        %s208 = scalar_lea.sflag [#allocation3], %s207
        %s209 = sand.u32 %s44, 1
        %s210 = smul.addr %s209, 16
        %s211 = scalar_lea.vmem [#allocation2], %s210
        %p212 = pneg %p57
        %p213 = pneg %p54
        %s214 = sand.u32 %s72, 1
        %s215 = scalar_lea.sflag [#allocation6], %s214
        %s216 = sand.u32 %s72, 1
        %s217 = smul.addr %s216, 16
        %s218 = scalar_lea.vmem [#allocation5], %s217
        %p219 = pneg %p85
        %p220 = pneg %p82
        %p221 = pneg %p113
        %p222 = pneg %p110
        %s223 = sand.u32 %s100, 1
        %s224 = scalar_lea.sflag [#allocation4], %s223
        %s225 = sand.u32 %s100, 1
        %s226 = smul.addr %s225, 64
        %s227 = scalar_lea.vmem [#allocation7], %s226
        %s228 = smul.u32 2, %s27
        %s229 = smul.u32 2, %s27
        %s230 = smul.u32 2, %s27
        %v231 = vld [vmem:[%s191] sm:$0xff]
        %v232 = vld [vmem:[%s191 + $0x8] sm:$0xff]
        %v233 = vld [vmem:[%s201] sm:$0xff]
        %v234 = vld [vmem:[%s201 + $0x8] sm:$0xff]
        %v235 = vlaneseq
        %v236 = vand.u32 %v235, 127
        %vm237 = vcmp.lt.s32.totalorder %v236, 128
        %v238 = vmul.f32 %v233, %v231
        %v239 = vmul.f32 %v234, %v232
        %v240 = vsel %vm237, 1, 0
        %vm241 = vcmp.eq.s32.totalorder %v240, 1
        %v242 = vsel %vm241, %v238, 0.0
        %v243 = vsel %vm241, %v239, 0.0
        %244 = vst [vmem:[%s227] sm:$0xff] %v242
        %245 = vst [vmem:[%s227 + $0x8] sm:$0xff] %v243
        %246 = vrot.lane.b32.xlu0 %v231, 127
        %v247 = vpop.permute.xlu0 %246
        %248 = vrot.lane.b32.xlu0 %v232, 127
        %v249 = vpop.permute.xlu0 %248
        %vm250 = vcmp.lt.s32.totalorder %v236, 127
        %v251 = vmul.f32 %v233, %v247
        %v252 = vmul.f32 %v234, %v249
        %v253 = vsel %vm250, 1, 0
        %vm254 = vcmp.eq.s32.totalorder %v253, 1
        %v255 = vsel %vm254, %v251, 0.0
        %v256 = vsel %vm254, %v252, 0.0
        %s257 = scalar_lea.vmem %s227, 16 [#allocation7]
        %258 = vst [vmem:[%s257] sm:$0xff] %v255
        %259 = vst [vmem:[%s257 + $0x8] sm:$0xff] %v256
        %260 = vrot.lane.b32.xlu0 %v231, 126
        %v261 = vpop.permute.xlu0 %260
        %262 = vrot.lane.b32.xlu0 %v232, 126
        %v263 = vpop.permute.xlu0 %262
        %vm264 = vcmp.lt.s32.totalorder %v236, 126
        %v265 = vmul.f32 %v233, %v261
        %v266 = vmul.f32 %v234, %v263
        %v267 = vsel %vm264, 1, 0
        %vm268 = vcmp.eq.s32.totalorder %v267, 1
        %v269 = vsel %vm268, %v265, 0.0
        %v270 = vsel %vm268, %v266, 0.0
        %s271 = scalar_lea.vmem %s227, 32 [#allocation7]
        %272 = vst [vmem:[%s271] sm:$0xff] %v269
        %273 = vst [vmem:[%s271 + $0x8] sm:$0xff] %v270
        %274 = vrot.lane.b32.xlu0 %v231, 125
        %v275 = vpop.permute.xlu0 %274
        %276 = vrot.lane.b32.xlu0 %v232, 125
        %v277 = vpop.permute.xlu0 %276
        %vm278 = vcmp.lt.s32.totalorder %v236, 125
        %v279 = vmul.f32 %v233, %v275
        %v280 = vmul.f32 %v234, %v277
        %v281 = vsel %vm278, 1, 0
        %vm282 = vcmp.eq.s32.totalorder %v281, 1
        %v283 = vsel %vm282, %v279, 0.0
        %v284 = vsel %vm282, %v280, 0.0
        %s285 = scalar_lea.vmem %s227, 48 [#allocation7]
        %286 = vst [vmem:[%s285] sm:$0xff] %v283
        %287 = vst [vmem:[%s285 + $0x8] sm:$0xff] %v284
        %s288 = sand.u32 %s100, 1
        %s289 = scalar_lea.sflag [#allocation4], %s288
        %s290 = sand.u32 %s100, 1
        %s291 = smul.addr %s290, 64
        %s292 = scalar_lea.vmem [#allocation7], %s291
        // Predicated region
        $region37: #{tpu_custom_call.1} parent=27 // pred_check
          %p293 = pneg %p110
        $region38: #{tpu_custom_call.1} parent=27 // pred_check_branch
          %295 = sbr.rel (%p293) target = $region40
        $region39: #{tpu_custom_call.1} parent=27 // pred_region
          %s296 = smul.u32 2, %s27
          %298 = vsyncadd %s289, 0
          %s299 = smul.addr %s26, 8
          %s300 = sadd.s32 %s296, %s299
          %s301 = smul.addr %s300, 8
          %s302 = scalar_lea.hbm %s2, %s301
          %s303 = sshll.u32 %s292, 4
          %s304 = int_to_ptr.vmem [resolvable:$true] %s303
          %s305 = sshll.u32 %s302, 4
          %s306 = int_to_ptr.hbm [resolvable:$true] %s305
          %311 = dma.vmem_to_hbm [thread:$0]  %s304, 1024, %s306, %s289, 128, 128, 8
        $region40: #{tpu_custom_call.1} parent=27 // pred_fallthru
          _
      $region28: #{tpu_custom_call.1} parent=5 // pred_fallthru
        _
      %p312 = scmp.le.s32.totalorder 2, %s17
      // Predicated region
      $region41: #{tpu_custom_call.1} parent=5 // pred_check
        %p313 = pneg %p312
      $region42: #{tpu_custom_call.1} parent=5 // pred_check_branch
        %315 = sbr.rel (%p313) target = $region44
      $region43: #{tpu_custom_call.1} parent=5 // pred_region
        %s316 = ssub.s32 %s17, 2
        // Predicated region
        $region45: #{tpu_custom_call.1} parent=43 // pred_check
          %p317 = pneg %p116
        $region46: #{tpu_custom_call.1} parent=43 // pred_check_branch
          %319 = sbr.rel (%p317) target = $region48
        $region47: #{tpu_custom_call.1} parent=43 // pred_region
          %s320 = sand.u32 %s101, 1
          %s321 = scalar_lea.sflag [#allocation4], %s320
          %s322 = sand.u32 %s101, 1
          %s323 = smul.addr %s322, 64
          %s324 = scalar_lea.vmem [#allocation7], %s323
          %326 = dma.done %s321, 1024
        $region48: #{tpu_custom_call.1} parent=43 // pred_fallthru
          _
      $region44: #{tpu_custom_call.1} parent=5 // pred_fallthru
        _
    $region6: #{tpu_custom_call.1} parent=1 // loop_footer
      %s21 = sadd.s32 1, %s17
    $region7: #{tpu_custom_call.1} parent=1 // loop_footer_branch
      %16 = sbr.rel target = $region3
    $region8: #{tpu_custom_call.1} parent=1 // loop_exit
      _
    %327 = vsyncpa [#allocation3], 1
    %s328 = scalar_lea.sflag [#allocation3], 1
    %329 = vsyncpa %s328, 1
    %330 = vsyncpa [#allocation6], 1
    %s331 = scalar_lea.sflag [#allocation6], 1
    %332 = vsyncpa %s331, 1
    %333 = vsyncpa [#allocation4], 1
    %s334 = scalar_lea.sflag [#allocation4], 1
    %335 = vsyncpa %s334, 1

</llo_original>
